<compile_context>
chip_gen: v7x
topology: tpu7x:2x2x1
jax: 0.10.0
libtpu: 0.0.40
codegen_flags: <defaults>
</compile_context>

<pallas_src>
import jax
import jax.numpy as jnp
from jax import lax
from jax.experimental import pallas as pl
from jax.experimental.pallas import tpu as pltpu


def _upsample_matrix(in_size: int, out_size: int) -> jnp.ndarray:
    """Row-stochastic (out_size, in_size) matrix reproducing PyTorch
    nn.Upsample(mode='bilinear', align_corners=False) along one axis."""
    scale = in_size / out_size
    dst = jnp.arange(out_size, dtype=jnp.float32)
    src = jnp.maximum((dst + 0.5) * scale - 0.5, 0.0)  # PyTorch clamps negatives to 0
    i0 = jnp.clip(jnp.floor(src).astype(jnp.int32), 0, in_size - 1)
    i1 = jnp.minimum(i0 + 1, in_size - 1)
    lam = src - i0.astype(jnp.float32)
    U = jnp.zeros((out_size, in_size), jnp.float32)
    U = U.at[jnp.arange(out_size), i0].add(1.0 - lam)
    U = U.at[jnp.arange(out_size), i1].add(lam)
    return U


def _up_conv_kernel(x_ref, w_ref, ut_ref, o_ref):
    # x_ref  : (1, Cin, Sin)    flattened input spatial (Sin = Hin*Win)
    # w_ref  : (Cout, Cin)      1x1 conv weight
    # ut_ref : (Sin, Sout)      transposed Kronecker upsample matrix
    # o_ref  : (1, Cout, Sout)  flattened output spatial (Sout = Hout*Wout)
    x = x_ref[0]                                     # (Cin, Sin)

    # --- 1x1 conv first (commutes with bilinear upsample), MXU matmul ---
    z = jnp.dot(w_ref[...], x,
                preferred_element_type=jnp.float32)  # (Cout, Sin)

    # --- fused bilinear upsample: single lane-dense MXU matmul ---
    y = jnp.dot(z, ut_ref[...],
                preferred_element_type=jnp.float32)  # (Cout, Sout)

    # --- InstanceNorm2d (affine=False, eps=1e-5): one-pass mean/var per row ---
    mean = jnp.mean(y, axis=-1, keepdims=True)
    mean_sq = jnp.mean(y * y, axis=-1, keepdims=True)
    var = jnp.maximum(mean_sq - mean * mean, 0.0)    # clamp f32 cancellation
    yn = (y - mean) * lax.rsqrt(var + 1e-5)

    # --- LeakyReLU (negative_slope=0.01) ---
    o_ref[0] = jnp.where(yn >= 0.0, yn, 0.01 * yn)


def up_conv_forward(x, w, b=None):
    """x: (N, Cin, H, W) float32; w: (Cout, Cin); b: (Cout,) (ignored: a
    per-channel constant bias is exactly cancelled by InstanceNorm2d)."""
    del b
    N, Cin, Hin, Win = x.shape
    Cout = w.shape[0]
    Hout, Wout = 2 * Hin, 2 * Win
    Sin, Sout = Hin * Win, Hout * Wout

    uh = _upsample_matrix(Hin, Hout)                 # (Hout, Hin)
    uw = _upsample_matrix(Win, Wout)                 # (Wout, Win)
    ut = jnp.kron(uh, uw).T                          # (Sin, Sout)

    x_flat = x.reshape(N, Cin, Sin)                  # free contiguous view

    out_flat = pl.pallas_call(
        _up_conv_kernel,
        out_shape=jax.ShapeDtypeStruct((N, Cout, Sout), jnp.float32),
        grid_spec=pltpu.PrefetchScalarGridSpec(
            num_scalar_prefetch=0,
            grid=(N,),
            in_specs=[
                pl.BlockSpec((1, Cin, Sin), lambda n: (n, 0, 0)),
                pl.BlockSpec((Cout, Cin), lambda n: (0, 0)),
                pl.BlockSpec((Sin, Sout), lambda n: (0, 0)),
            ],
            out_specs=pl.BlockSpec((1, Cout, Sout), lambda n: (n, 0, 0)),
        ),
        compiler_params=pltpu.CompilerParams(
            dimension_semantics=("parallel",)),
    )(x_flat, w, ut)

    return out_flat.reshape(N, Cout, Hout, Wout)     # free contiguous view


def _reference(x, w, b):
    """Pure-JAX reference of the original module ordering:
    upsample -> conv1x1 (+bias) -> InstanceNorm -> LeakyReLU."""
    N, Cin, Hin, Win = x.shape
    Cout = w.shape[0]
    uh = _upsample_matrix(Hin, 2 * Hin)
    uw = _upsample_matrix(Win, 2 * Win)
    xw = jnp.einsum('nchw,vw->nchv', x, uw)
    up = jnp.einsum('nchv,uh->ncuv', xw, uh)
    y = jnp.einsum('oc,ncuv->nouv', w, up) + b.reshape(1, Cout, 1, 1)
    mean = y.mean(axis=(2, 3), keepdims=True)
    var = ((y - mean) ** 2).mean(axis=(2, 3), keepdims=True)
    yn = (y - mean) / jnp.sqrt(var + 1e-5)
    return jnp.where(yn >= 0, yn, 0.01 * yn)


if __name__ == "__main__":
    # Small shapes consistent with the module: N=2, ch_in=4, ch_out=8, 16x16 spatial.
    N, CH_IN, CH_OUT, H, W = 2, 4, 8, 16, 16

    key = jax.random.PRNGKey(0)
    kx, kw, kb = jax.random.split(key, 3)
    x = jax.random.normal(kx, (N, CH_IN, H, W), dtype=jnp.float32)

    # Deterministic Conv2d(1x1) param init (PyTorch-style uniform bound 1/sqrt(fan_in)).
    bound = 1.0 / (CH_IN ** 0.5)
    w = jax.random.uniform(kw, (CH_OUT, CH_IN), jnp.float32, -bound, bound)
    b = jax.random.uniform(kb, (CH_OUT,), jnp.float32, -bound, bound)

    out = up_conv_forward(x, w, b)
    out = jax.block_until_ready(out)

    ref = _reference(x, w, b)
    assert out.shape == (N, CH_OUT, 2 * H, 2 * W)
    assert jnp.allclose(out, ref, rtol=1e-4, atol=1e-4), "mismatch vs reference"

    print("KERNEL_OK")
</pallas_src>

<mosaic_0001>
module attributes {stable_mosaic.version = 11 : i64} {
  func.func @_up_conv_kernel(%arg0: i32, %arg1: memref<1x4x256xf32, #tpu.memory_space<vmem>>, %arg2: memref<8x4xf32, #tpu.memory_space<vmem>>, %arg3: memref<256x1024xf32, #tpu.memory_space<vmem>>, %arg4: memref<1x8x1024xf32, #tpu.memory_space<vmem>>) attributes {dimension_semantics = [#tpu.dimension_semantics<parallel>], iteration_bounds = array<i64: 2>, scalar_prefetch = 0 : i64, scratch_operands = 0 : i64, tpu.core_type = #tpu.core_type<tc>, window_params = [{transform_indices = @transform_0, window_bounds = array<i64: 1, 4, 256>}, {pipeline_mode = #tpu.pipeline_mode<synchronous>, transform_indices = @transform_1, window_bounds = array<i64: 8, 4>}, {pipeline_mode = #tpu.pipeline_mode<synchronous>, transform_indices = @transform_2, window_bounds = array<i64: 256, 1024>}, {transform_indices = @transform_3, window_bounds = array<i64: 1, 8, 1024>}]} {
    %c0 = arith.constant 0 : index
    %c0_0 = arith.constant 0 : index
    %c0_1 = arith.constant 0 : index
    %0 = vector.load %arg1[%c0, %c0_0, %c0_1] : memref<1x4x256xf32, #tpu.memory_space<vmem>>, vector<1x4x256xf32>
    %1 = vector.shape_cast %0 : vector<1x4x256xf32> to vector<4x256xf32>
    %c0_2 = arith.constant 0 : index
    %c0_3 = arith.constant 0 : index
    %2 = vector.load %arg2[%c0_2, %c0_3] : memref<8x4xf32, #tpu.memory_space<vmem>>, vector<8x4xf32>
    %cst = arith.constant dense<0.000000e+00> : vector<8x256xf32>
    %3 = tpu.matmul %2, %1, %cst {dimension_numbers = #tpu.dot_dimension_numbers<[1], [0], [0], [1], [0, 0, 1, 1], [], []>} : vector<8x4xf32>, vector<4x256xf32>, vector<8x256xf32> -> vector<8x256xf32>
    %c0_4 = arith.constant 0 : index
    %c0_5 = arith.constant 0 : index
    %4 = vector.load %arg3[%c0_4, %c0_5] : memref<256x1024xf32, #tpu.memory_space<vmem>>, vector<256x1024xf32>
    %cst_6 = arith.constant dense<0.000000e+00> : vector<8x1024xf32>
    %5 = tpu.matmul %3, %4, %cst_6 {dimension_numbers = #tpu.dot_dimension_numbers<[1], [0], [0], [1], [0, 0, 1, 1], [], []>} : vector<8x256xf32>, vector<256x1024xf32>, vector<8x1024xf32> -> vector<8x1024xf32>
    %cst_7 = arith.constant dense<0.000000e+00> : vector<8xf32>
    %6 = vector.multi_reduction <add>, %5, %cst_7 [1] : vector<8x1024xf32> to vector<8xf32>
    %7 = vector.shape_cast %6 : vector<8xf32> to vector<8x1xf32>
    %cst_8 = arith.constant 1.024000e+03 : f32
    %8 = vector.broadcast %cst_8 : f32 to vector<8x1xf32>
    %9 = arith.divf %7, %8 : vector<8x1xf32>
    %10 = arith.mulf %5, %5 : vector<8x1024xf32>
    %cst_9 = arith.constant dense<0.000000e+00> : vector<8xf32>
    %11 = vector.multi_reduction <add>, %10, %cst_9 [1] : vector<8x1024xf32> to vector<8xf32>
    %12 = vector.shape_cast %11 : vector<8xf32> to vector<8x1xf32>
    %cst_10 = arith.constant 1.024000e+03 : f32
    %13 = vector.broadcast %cst_10 : f32 to vector<8x1xf32>
    %14 = arith.divf %12, %13 : vector<8x1xf32>
    %15 = arith.mulf %9, %9 : vector<8x1xf32>
    %16 = arith.subf %14, %15 : vector<8x1xf32>
    %cst_11 = arith.constant 0.000000e+00 : f32
    %17 = vector.broadcast %cst_11 : f32 to vector<8x1xf32>
    %18 = arith.maximumf %16, %17 : vector<8x1xf32>
    %19 = vector.broadcast %9 : vector<8x1xf32> to vector<8x1024xf32>
    %20 = arith.subf %5, %19 : vector<8x1024xf32>
    %cst_12 = arith.constant 9.99999974E-6 : f32
    %21 = vector.broadcast %cst_12 : f32 to vector<8x1xf32>
    %22 = arith.addf %18, %21 : vector<8x1xf32>
    %23 = math.rsqrt %22 : vector<8x1xf32>
    %24 = vector.broadcast %23 : vector<8x1xf32> to vector<8x1024xf32>
    %25 = arith.mulf %20, %24 : vector<8x1024xf32>
    %cst_13 = arith.constant 0.000000e+00 : f32
    %26 = vector.broadcast %cst_13 : f32 to vector<8x1024xf32>
    %27 = arith.cmpf oge, %25, %26 : vector<8x1024xf32>
    %cst_14 = arith.constant 0.00999999977 : f32
    %28 = vector.broadcast %cst_14 : f32 to vector<8x1024xf32>
    %29 = arith.mulf %28, %25 : vector<8x1024xf32>
    %30 = arith.select %27, %25, %29 : vector<8x1024xi1>, vector<8x1024xf32>
    %c0_15 = arith.constant 0 : index
    %c0_16 = arith.constant 0 : index
    %c0_17 = arith.constant 0 : index
    %31 = vector.load %arg4[%c0_15, %c0_16, %c0_17] : memref<1x8x1024xf32, #tpu.memory_space<vmem>>, vector<1x8x1024xf32>
    %32 = vector.shape_cast %31 : vector<1x8x1024xf32> to vector<8x1024xf32>
    %33 = vector.shape_cast %30 : vector<8x1024xf32> to vector<1x8x1024xf32>
    tpu.vector_store %arg4[%c0_15, %c0_16, %c0_17], %33 {strides = array<i32>} : memref<1x8x1024xf32, #tpu.memory_space<vmem>>, vector<1x8x1024xf32>,
    return
  }
  func.func @transform_0(%arg0: i32) -> (i32, i32, i32) {
    %c0_i32 = arith.constant 0 : i32
    %c0_i32_0 = arith.constant 0 : i32
    %c0_i32_1 = arith.constant 0 : i32
    return %arg0, %c0_i32, %c0_i32_0 : i32, i32, i32
  }
  func.func @transform_1(%arg0: i32) -> (i32, i32) {
    %c0_i32 = arith.constant 0 : i32
    %c0_i32_0 = arith.constant 0 : i32
    %c0_i32_1 = arith.constant 0 : i32
    return %c0_i32, %c0_i32_0 : i32, i32
  }
  func.func @transform_2(%arg0: i32) -> (i32, i32) {
    %c0_i32 = arith.constant 0 : i32
    %c0_i32_0 = arith.constant 0 : i32
    %c0_i32_1 = arith.constant 0 : i32
    return %c0_i32, %c0_i32_0 : i32, i32
  }
  func.func @transform_3(%arg0: i32) -> (i32, i32, i32) {
    %c0_i32 = arith.constant 0 : i32
    %c0_i32_0 = arith.constant 0 : i32
    %c0_i32_1 = arith.constant 0 : i32
    return %arg0, %c0_i32, %c0_i32_0 : i32, i32, i32
  }
}

</mosaic_0001>

<llo_original>
// kernel: tpu_custom_call.1
$region0: #{tpu_custom_call.1}
  #allocation0 [shape = 'u32[]', space=smem, size = 0x4, offset = 0x4, fixed_abs, tag = 'smem constant byte address 0x4 - core index']
  #allocation1 [shape = 'u32[144,128]{1,0:T(1,128)}', space=vmem, size = 0x12000, scoped, tag = 'internal scratch']
  %s0 = inlined_call_operand.hbm [shape: f32[2,4,256], index: 0, kind: input, shape index: {}]
  %s1 = inlined_call_operand.vmem [shape: f32[8,4], index: 1, kind: input, shape index: {}]
  %s2 = inlined_call_operand.hbm [shape: f32[256,1024], index: 2, kind: input, shape index: {}]
  %s3 = inlined_call_operand.hbm [shape: f32[2,8,1024], index: 3, kind: output, shape index: {}]
  %s4 = sld [smem:[#allocation0]]
  $region53: #{tpu_custom_call.1} parent=0
    _
  %s6 = ssub.s32 1, %s4
  %s7 = scalar_select 0, %s6, %s4
  $region1: #{tpu_custom_call.1} parent=0
    #allocation2 [shape = 'u8[8192]{0}', space=vmem, size = 0x2000, scoped, tag = 'input window, operand 0']
    #allocation3 [shape = 's32[2]{0}', space=sflag, size = 0x8, scoped, tag = 'scoped memory for tpu_custom_call.1']
    #allocation4 [shape = 's32[2]{0}', space=sflag, size = 0x8, scoped, tag = 'scoped memory for tpu_custom_call.1']
    #allocation5 [shape = 'u8[1048576]{0}', space=vmem, size = 0x100000, scoped, tag = 'input window, operand 2, single buffered']
    #allocation6 [shape = 's32[1]{0}', space=sflag, size = 0x4, scoped, tag = 'scoped memory for tpu_custom_call.1']
    #allocation7 [shape = 'u8[65536]{0}', space=vmem, size = 0x10000, scoped, tag = 'output window, operand 0']
    %8 = vsyncpa [#allocation3], 0
    %s9 = scalar_lea.sflag [#allocation3], 1
    %10 = vsyncpa %s9, 0
    %11 = vsyncpa [#allocation6], 0
    %12 = vsyncpa [#allocation4], 0
    %s13 = scalar_lea.sflag [#allocation4], 1
    %14 = vsyncpa %s13, 0
    loop: start=0, step=1, limit=4
    $region2: #{tpu_custom_call.1} parent=1 // loop_pre_header
      _
    $region3: #{tpu_custom_call.1} parent=1 // loop_header
      %s16 = sphi 0, %s20
      %p17 = scmp.ge.s32.totalorder %s16, 4
      %s26 = sphi 0, %s28
      %s29 = sphi 0, %s26
      %s30 = sphi 0, %s29
      %s46 = sphi 0, %s30
      %s50 = sphi 0, %s50
      %s52 = sphi 0, %s50
      %s53 = sphi 0, %s52
      %s67 = sphi 0, %s53
      %s71 = sphi 0, %s71
      %s73 = sphi 0, %s71
      %s74 = sphi 0, %s73
      %s88 = sphi 0, %s74
      %s94 = sphi 0, %s96
      %s97 = sphi 0, %s94
      %s98 = sphi 0, %s97
      %s114 = sphi 0, %s98
    $region4: #{tpu_custom_call.1} parent=1 // loop_header_branch
      %19 = sbr.rel (%p17) target = $region8
    $region5: #{tpu_custom_call.1} parent=1 // loop_body
      %s21 = ssub.s32 %s16, 1
      %s22 = ssub.s32 %s16, 2
      %s23 = sadd.s32 %s16, 1
      %s24 = ssub.s32 %s16, %s23
      %p25 = scmp.eq.s32.totalorder %s24, 0
      %s27 = sadd.s32 %s26, 1
      %s28 = scalar_select %p25, %s26, %s27
      %p31 = pneg %p25
      %p32 = scmp.eq.s32.totalorder %s16, 1
      %p33 = por %p31, %p32
      %p34 = scmp.ne.s32.totalorder %s26, %s29
      %p35 = scmp.eq.s32.totalorder %s16, 0
      %p36 = por %p34, %p35
      %p37 = scmp.ne.s32.totalorder %s26, %s29
      %p38 = scmp.eq.s32.totalorder %s21, 1
      %p39 = por %p37, %p38
      %p40 = scmp.ne.s32.totalorder %s29, %s30
      %p41 = scmp.eq.s32.totalorder %s21, 0
      %p42 = por %p40, %p41
      %p43 = scmp.ne.s32.totalorder %s29, %s30
      %p44 = scmp.eq.s32.totalorder %s22, 1
      %p45 = por %p43, %p44
      %p47 = scmp.ne.s32.totalorder %s30, %s46
      %p48 = scmp.eq.s32.totalorder %s22, 0
      %p49 = por %p47, %p48
      %s51 = sadd.s32 %s50, 1
      %p54 = scmp.eq.s32.totalorder %s16, 1
      %p55 = scmp.ne.s32.totalorder %s50, %s52
      %p56 = scmp.eq.s32.totalorder %s16, 0
      %p57 = por %p55, %p56
      %p58 = scmp.ne.s32.totalorder %s50, %s52
      %p59 = scmp.eq.s32.totalorder %s21, 1
      %p60 = por %p58, %p59
      %p61 = scmp.ne.s32.totalorder %s52, %s53
      %p62 = scmp.eq.s32.totalorder %s21, 0
      %p63 = por %p61, %p62
      %p64 = scmp.ne.s32.totalorder %s52, %s53
      %p65 = scmp.eq.s32.totalorder %s22, 1
      %p66 = por %p64, %p65
      %p68 = scmp.ne.s32.totalorder %s53, %s67
      %p69 = scmp.eq.s32.totalorder %s22, 0
      %p70 = por %p68, %p69
      %s72 = sadd.s32 %s71, 1
      %p75 = scmp.eq.s32.totalorder %s16, 1
      %p76 = scmp.ne.s32.totalorder %s71, %s73
      %p77 = scmp.eq.s32.totalorder %s16, 0
      %p78 = por %p76, %p77
      %p79 = scmp.ne.s32.totalorder %s71, %s73
      %p80 = scmp.eq.s32.totalorder %s21, 1
      %p81 = por %p79, %p80
      %p82 = scmp.ne.s32.totalorder %s73, %s74
      %p83 = scmp.eq.s32.totalorder %s21, 0
      %p84 = por %p82, %p83
      %p85 = scmp.ne.s32.totalorder %s73, %s74
      %p86 = scmp.eq.s32.totalorder %s22, 1
      %p87 = por %p85, %p86
      %p89 = scmp.ne.s32.totalorder %s74, %s88
      %p90 = scmp.eq.s32.totalorder %s22, 0
      %p91 = por %p89, %p90
      %s92 = ssub.s32 %s16, %s23
      %p93 = scmp.eq.s32.totalorder %s92, 0
      %s95 = sadd.s32 %s94, 1
      %s96 = scalar_select %p93, %s94, %s95
      %p99 = pneg %p93
      %p100 = scmp.eq.s32.totalorder %s16, 1
      %p101 = por %p99, %p100
      %p102 = scmp.ne.s32.totalorder %s94, %s97
      %p103 = scmp.eq.s32.totalorder %s16, 0
      %p104 = por %p102, %p103
      %p105 = scmp.ne.s32.totalorder %s94, %s97
      %p106 = scmp.eq.s32.totalorder %s21, 1
      %p107 = por %p105, %p106
      %p108 = scmp.ne.s32.totalorder %s97, %s98
      %p109 = scmp.eq.s32.totalorder %s21, 0
      %p110 = por %p108, %p109
      %p111 = scmp.ne.s32.totalorder %s97, %s98
      %p112 = scmp.eq.s32.totalorder %s22, 1
      %p113 = por %p111, %p112
      %p115 = scmp.ne.s32.totalorder %s98, %s114
      %p116 = scmp.eq.s32.totalorder %s22, 0
      %p117 = por %p115, %p116
      %p118 = scmp.le.s32.totalorder 1, %s16
      %p119 = scmp.lt.s32.totalorder %s16, 3
      %p120 = pnand %p118, %p119
      %p121 = pneg %p120
      // Predicated region
      $region9: #{tpu_custom_call.1} parent=5 // pred_check
        _
      $region10: #{tpu_custom_call.1} parent=5 // pred_check_branch
        %123 = sbr.rel (%p120) target = $region12
      $region11: #{tpu_custom_call.1} parent=5 // pred_region
        %s124 = ssub.s32 %s16, 1
        // Predicated region
        $region13: #{tpu_custom_call.1} parent=11 // pred_check
          %p125 = pneg %p63
        $region14: #{tpu_custom_call.1} parent=11 // pred_check_branch
          %127 = sbr.rel (%p125) target = $region16
        $region15: #{tpu_custom_call.1} parent=11 // pred_region
          _
        $region16: #{tpu_custom_call.1} parent=11 // pred_fallthru
          _
        // Predicated region
        $region17: #{tpu_custom_call.1} parent=11 // pred_check
          %p128 = pneg %p84
        $region18: #{tpu_custom_call.1} parent=11 // pred_check_branch
          %130 = sbr.rel (%p128) target = $region20
        $region19: #{tpu_custom_call.1} parent=11 // pred_region
          %s132 = ssub.s32 32768, 32768
          %133 = vsyncadd [#allocation6], %s132
          %s134 = sshll.u32 [#allocation5], 4
          %s135 = int_to_ptr.vmem [resolvable:$true] %s134
          %140 = dma.hbm_to_vmem [thread:$0]  %s2, 32768, %s135, [#allocation6], 1024, 1024, 64
        $region20: #{tpu_custom_call.1} parent=11 // pred_fallthru
          _
      $region12: #{tpu_custom_call.1} parent=5 // pred_fallthru
        _
      %p141 = scmp.lt.s32.totalorder %s16, 2
      // Predicated region
      $region21: #{tpu_custom_call.1} parent=5 // pred_check
        %p142 = pneg %p141
      $region22: #{tpu_custom_call.1} parent=5 // pred_check_branch
        %144 = sbr.rel (%p142) target = $region24
      $region23: #{tpu_custom_call.1} parent=5 // pred_region
        // Predicated region
        $region25: #{tpu_custom_call.1} parent=23 // pred_check
          %p145 = pneg %p36
        $region26: #{tpu_custom_call.1} parent=23 // pred_check_branch
          %147 = sbr.rel (%p145) target = $region28
        $region27: #{tpu_custom_call.1} parent=23 // pred_region
          %s148 = sand.u32 %s26, 1
          %s149 = scalar_lea.sflag [#allocation3], %s148
          %s150 = sand.u32 %s26, 1
          %s151 = smul.addr %s150, 8
          %s152 = scalar_lea.vmem [#allocation2], %s151
          %s154 = ssub.s32 128, 128
          %155 = vsyncadd %s149, %s154
          %s156 = smul.addr %s16, 2
          %s157 = smul.addr %s156, 64
          %s158 = scalar_lea.hbm %s0, %s157
          %s160 = sshll.u32 %s152, 4
          %s161 = int_to_ptr.vmem [resolvable:$true] %s160
          %163 = dma.hbm_to_vmem [thread:$0]  %s158, 128, %s161, %s149
        $region28: #{tpu_custom_call.1} parent=23 // pred_fallthru
          _
      $region24: #{tpu_custom_call.1} parent=5 // pred_fallthru
        _
      %p164 = scmp.le.s32.totalorder 1, %s16
      %p165 = scmp.lt.s32.totalorder %s16, 3
      %p166 = pnand %p164, %p165
      %p167 = pneg %p166
      // Predicated region
      $region29: #{tpu_custom_call.1} parent=5 // pred_check
        _
      $region30: #{tpu_custom_call.1} parent=5 // pred_check_branch
        %169 = sbr.rel (%p166) target = $region32
      $region31: #{tpu_custom_call.1} parent=5 // pred_region
        %s170 = ssub.s32 %s16, 1
        %s171 = sand.u32 %s29, 1
        %s172 = scalar_lea.sflag [#allocation3], %s171
        %s173 = sand.u32 %s29, 1
        %s174 = smul.addr %s173, 8
        %s175 = scalar_lea.vmem [#allocation2], %s174
        // Predicated region
        $region33: #{tpu_custom_call.1} parent=31 // pred_check
          %p176 = pneg %p42
        $region34: #{tpu_custom_call.1} parent=31 // pred_check_branch
          %178 = sbr.rel (%p176) target = $region36
        $region35: #{tpu_custom_call.1} parent=31 // pred_region
          %179 = dma.done %s172, 128
        $region36: #{tpu_custom_call.1} parent=31 // pred_fallthru
          _
        // Predicated region
        $region37: #{tpu_custom_call.1} parent=31 // pred_check
          %p180 = pneg %p84
        $region38: #{tpu_custom_call.1} parent=31 // pred_check_branch
          %182 = sbr.rel (%p180) target = $region40
        $region39: #{tpu_custom_call.1} parent=31 // pred_region
          %183 = dma.done [#allocation6], 32768
        $region40: #{tpu_custom_call.1} parent=31 // pred_fallthru
          _
        %s184 = sand.u32 %s29, 1
        %s185 = scalar_lea.sflag [#allocation3], %s184
        %s186 = sand.u32 %s29, 1
        %s187 = smul.addr %s186, 8
        %s188 = scalar_lea.vmem [#allocation2], %s187
        %p189 = pneg %p42
        %p190 = pneg %p39
        %p191 = pneg %p63
        %p192 = pneg %p60
        %p193 = pneg %p84
        %p194 = pneg %p81
        %p195 = pneg %p110
        %p196 = pneg %p107
        %s197 = sand.u32 %s97, 1
        %s198 = scalar_lea.sflag [#allocation4], %s197
        %s199 = sand.u32 %s97, 1
        %s200 = smul.addr %s199, 64
        %s201 = scalar_lea.vmem [#allocation7], %s200
        %v202 = vld [vmem:[%s175] sm:$0xff]
        %v203 = vld [vmem:[%s1] sm:$0xff]
        %v205 = vcombine.high %v202, %v202
        %vm206 = vcmask 31744
        %v208 = vsel %vm206, %v203, 0
        %vm210 = vcmask 1043456
        %v211 = vsel %vm210, %v202, 0
        %v213 = vsel %vm210, %v205, 0
        %215 = vmatprep.subr.mxu0 %v213
        %216 = vmatpush1.msra.mxu0 %v211
        %217 = vmatprep.subr.mxu0 0.0
        %218 = vmatpush1.msra.mxu0 0.0
        %219 = vmatprep.subr.mxu0 0.0
        %220 = vmatpush1.msra.mxu0 0.0
        %221 = vmatprep.subr.mxu0 0.0
        %222 = vmatpush1.msra.mxu0 0.0
        %223 = vmatprep.subr.mxu0 0.0
        %224 = vmatpush1.msra.mxu0 0.0
        %225 = vmatprep.subr.mxu0 0.0
        %226 = vmatpush1.msra.mxu0 0.0
        %227 = vmatprep.subr.mxu0 0.0
        %228 = vmatpush1.msra.mxu0 0.0
        %229 = vmatprep.subr.mxu0 0.0
        %230 = vmatpush1.msra.mxu0 0.0
        %231 = vmatprep.subr.mxu0 0.0
        %232 = vmatpush1.msra.mxu0 0.0
        %233 = vmatprep.subr.mxu0 0.0
        %234 = vmatpush1.msra.mxu0 0.0
        %235 = vmatprep.subr.mxu0 0.0
        %236 = vmatpush1.msra.mxu0 0.0
        %237 = vmatprep.subr.mxu0 0.0
        %238 = vmatpush1.msra.mxu0 0.0
        %239 = vmatprep.subr.mxu0 0.0
        %240 = vmatpush1.msra.mxu0 0.0
        %241 = vmatprep.subr.mxu0 0.0
        %242 = vmatpush1.msra.mxu0 0.0
        %243 = vmatprep.subr.mxu0 0.0
        %244 = vmatpush1.msra.mxu0 0.0
        %245 = vmatprep.subr.mxu0 0.0
        %246 = vmatpush1.msra.mxu0 0.0
        %247 = vmatprep.subr.mxu0 0.0
        %248 = vmatpush1.msra.mxu0 0.0
        %249 = vmatprep.subr.mxu0 0.0
        %250 = vmatpush1.msra.mxu0 0.0
        %251 = vmatprep.subr.mxu0 0.0
        %252 = vmatpush1.msra.mxu0 0.0
        %253 = vmatprep.subr.mxu0 0.0
        %254 = vmatpush1.msra.mxu0 0.0
        %255 = vmatprep.subr.mxu0 0.0
        %256 = vmatpush1.msra.mxu0 0.0
        %257 = vmatprep.subr.mxu0 0.0
        %258 = vmatpush1.msra.mxu0 0.0
        %259 = vmatprep.subr.mxu0 0.0
        %260 = vmatpush1.msra.mxu0 0.0
        %261 = vmatprep.subr.mxu0 0.0
        %262 = vmatpush1.msra.mxu0 0.0
        %263 = vmatprep.subr.mxu0 0.0
        %264 = vmatpush1.msra.mxu0 0.0
        %265 = vmatprep.subr.mxu0 0.0
        %266 = vmatpush1.msra.mxu0 0.0
        %267 = vmatprep.subr.mxu0 0.0
        %268 = vmatpush1.msra.mxu0 0.0
        %269 = vmatprep.subr.mxu0 0.0
        %270 = vmatpush1.msra.mxu0 0.0
        %271 = vmatprep.subr.mxu0 0.0
        %272 = vmatpush1.msra.mxu0 0.0
        %273 = vmatprep.subr.mxu0 0.0
        %274 = vmatpush1.msra.mxu0 0.0
        %275 = vmatprep.subr.mxu0 0.0
        %276 = vmatpush1.msra.mxu0 0.0
        %277 = vmatprep.subr.mxu0 0.0
        %278 = vmatpush1.msra.mxu0 0.0
        %279 = vmatprep.mubr.f32.mxu0 0.0
        %280 = vmatmul.mubr.f32.gmra.mrb[0].mxu0 %v208
        %v281 = vpop.f32.mrb[0].mxu0
        %v282 = vadd.f32 0.0, %v281
        %v283 = vpop.f32.mrb[0].mxu0
        %v284 = vadd.f32 0.0, %v283
        %285 = vdwg.mxu0
        %v286 = vld [vmem:[#allocation5] sm:$0xff]
        %v287 = vld [vmem:[#allocation5 + $0x8] sm:$0xff]
        %v288 = vld [vmem:[#allocation5 + $0x10] sm:$0xff]
        %v289 = vld [vmem:[#allocation5 + $0x18] sm:$0xff]
        %v290 = vld [vmem:[#allocation5 + $0x20] sm:$0xff]
        %v291 = vld [vmem:[#allocation5 + $0x28] sm:$0xff]
        %v292 = vld [vmem:[#allocation5 + $0x30] sm:$0xff]
        %v293 = vld [vmem:[#allocation5 + $0x38] sm:$0xff]
        %v294 = vld [vmem:[#allocation5 + $0x40] sm:$0xff]
        %v295 = vld [vmem:[#allocation5 + $0x48] sm:$0xff]
        %v296 = vld [vmem:[#allocation5 + $0x50] sm:$0xff]
        %v297 = vld [vmem:[#allocation5 + $0x58] sm:$0xff]
        %v298 = vld [vmem:[#allocation5 + $0x60] sm:$0xff]
        %v299 = vld [vmem:[#allocation5 + $0x68] sm:$0xff]
        %v300 = vld [vmem:[#allocation5 + $0x70] sm:$0xff]
        %v301 = vld [vmem:[#allocation5 + $0x78] sm:$0xff]
        %v302 = vld [vmem:[#allocation5 + $0x80] sm:$0xff]
        %v303 = vld [vmem:[#allocation5 + $0x88] sm:$0xff]
        %v304 = vld [vmem:[#allocation5 + $0x90] sm:$0xff]
        %v305 = vld [vmem:[#allocation5 + $0x98] sm:$0xff]
        %v306 = vld [vmem:[#allocation5 + $0xa0] sm:$0xff]
        %v307 = vld [vmem:[#allocation5 + $0xa8] sm:$0xff]
        %v308 = vld [vmem:[#allocation5 + $0xb0] sm:$0xff]
        %v309 = vld [vmem:[#allocation5 + $0xb8] sm:$0xff]
        %v310 = vld [vmem:[#allocation5 + $0xc0] sm:$0xff]
        %v311 = vld [vmem:[#allocation5 + $0xc8] sm:$0xff]
        %v312 = vld [vmem:[#allocation5 + $0xd0] sm:$0xff]
        %v313 = vld [vmem:[#allocation5 + $0xd8] sm:$0xff]
        %v314 = vld [vmem:[#allocation5 + $0xe0] sm:$0xff]
        %v315 = vld [vmem:[#allocation5 + $0xe8] sm:$0xff]
        %v316 = vld [vmem:[#allocation5 + $0xf0] sm:$0xff]
        %v317 = vld [vmem:[#allocation5 + $0xf8] sm:$0xff]
        %v318 = vld [vmem:[#allocation5 + $0x100] sm:$0xff]
        %v319 = vld [vmem:[#allocation5 + $0x108] sm:$0xff]
        %v320 = vld [vmem:[#allocation5 + $0x110] sm:$0xff]
        %v321 = vld [vmem:[#allocation5 + $0x118] sm:$0xff]
        %v322 = vld [vmem:[#allocation5 + $0x120] sm:$0xff]
        %v323 = vld [vmem:[#allocation5 + $0x128] sm:$0xff]
        %v324 = vld [vmem:[#allocation5 + $0x130] sm:$0xff]
        %v325 = vld [vmem:[#allocation5 + $0x138] sm:$0xff]
        %v326 = vld [vmem:[#allocation5 + $0x140] sm:$0xff]
        %v327 = vld [vmem:[#allocation5 + $0x148] sm:$0xff]
        %v328 = vld [vmem:[#allocation5 + $0x150] sm:$0xff]
        %v329 = vld [vmem:[#allocation5 + $0x158] sm:$0xff]
        %v330 = vld [vmem:[#allocation5 + $0x160] sm:$0xff]
        %v331 = vld [vmem:[#allocation5 + $0x168] sm:$0xff]
        %v332 = vld [vmem:[#allocation5 + $0x170] sm:$0xff]
        %v333 = vld [vmem:[#allocation5 + $0x178] sm:$0xff]
        %v334 = vld [vmem:[#allocation5 + $0x180] sm:$0xff]
        %v335 = vld [vmem:[#allocation5 + $0x188] sm:$0xff]
        %v336 = vld [vmem:[#allocation5 + $0x190] sm:$0xff]
        %v337 = vld [vmem:[#allocation5 + $0x198] sm:$0xff]
        %v338 = vld [vmem:[#allocation5 + $0x1a0] sm:$0xff]
        %v339 = vld [vmem:[#allocation5 + $0x1a8] sm:$0xff]
        %v340 = vld [vmem:[#allocation5 + $0x1b0] sm:$0xff]
        %v341 = vld [vmem:[#allocation5 + $0x1b8] sm:$0xff]
        %v342 = vld [vmem:[#allocation5 + $0x1c0] sm:$0xff]
        %v343 = vld [vmem:[#allocation5 + $0x1c8] sm:$0xff]
        %v344 = vld [vmem:[#allocation5 + $0x1d0] sm:$0xff]
        %v345 = vld [vmem:[#allocation5 + $0x1d8] sm:$0xff]
        %v346 = vld [vmem:[#allocation5 + $0x1e0] sm:$0xff]
        %v347 = vld [vmem:[#allocation5 + $0x1e8] sm:$0xff]
        %v348 = vld [vmem:[#allocation5 + $0x1f0] sm:$0xff]
        %v349 = vld [vmem:[#allocation5 + $0x1f8] sm:$0xff]
        %v350 = vld [vmem:[#allocation5 + $0x200] sm:$0xff]
        %v351 = vld [vmem:[#allocation5 + $0x208] sm:$0xff]
        %v352 = vld [vmem:[#allocation5 + $0x210] sm:$0xff]
        %v353 = vld [vmem:[#allocation5 + $0x218] sm:$0xff]
        %v354 = vld [vmem:[#allocation5 + $0x220] sm:$0xff]
        %v355 = vld [vmem:[#allocation5 + $0x228] sm:$0xff]
        %v356 = vld [vmem:[#allocation5 + $0x230] sm:$0xff]
        %v357 = vld [vmem:[#allocation5 + $0x238] sm:$0xff]
        %v358 = vld [vmem:[#allocation5 + $0x240] sm:$0xff]
        %v359 = vld [vmem:[#allocation5 + $0x248] sm:$0xff]
        %v360 = vld [vmem:[#allocation5 + $0x250] sm:$0xff]
        %v361 = vld [vmem:[#allocation5 + $0x258] sm:$0xff]
        %v362 = vld [vmem:[#allocation5 + $0x260] sm:$0xff]
        %v363 = vld [vmem:[#allocation5 + $0x268] sm:$0xff]
        %v364 = vld [vmem:[#allocation5 + $0x270] sm:$0xff]
        %v365 = vld [vmem:[#allocation5 + $0x278] sm:$0xff]
        %v366 = vld [vmem:[#allocation5 + $0x280] sm:$0xff]
        %v367 = vld [vmem:[#allocation5 + $0x288] sm:$0xff]
        %v368 = vld [vmem:[#allocation5 + $0x290] sm:$0xff]
        %v369 = vld [vmem:[#allocation5 + $0x298] sm:$0xff]
        %v370 = vld [vmem:[#allocation5 + $0x2a0] sm:$0xff]
        %v371 = vld [vmem:[#allocation5 + $0x2a8] sm:$0xff]
        %v372 = vld [vmem:[#allocation5 + $0x2b0] sm:$0xff]
        %v373 = vld [vmem:[#allocation5 + $0x2b8] sm:$0xff]
        %v374 = vld [vmem:[#allocation5 + $0x2c0] sm:$0xff]
        %v375 = vld [vmem:[#allocation5 + $0x2c8] sm:$0xff]
        %v376 = vld [vmem:[#allocation5 + $0x2d0] sm:$0xff]
        %v377 = vld [vmem:[#allocation5 + $0x2d8] sm:$0xff]
        %v378 = vld [vmem:[#allocation5 + $0x2e0] sm:$0xff]
        %v379 = vld [vmem:[#allocation5 + $0x2e8] sm:$0xff]
        %v380 = vld [vmem:[#allocation5 + $0x2f0] sm:$0xff]
        %v381 = vld [vmem:[#allocation5 + $0x2f8] sm:$0xff]
        %v382 = vld [vmem:[#allocation5 + $0x300] sm:$0xff]
        %v383 = vld [vmem:[#allocation5 + $0x308] sm:$0xff]
        %v384 = vld [vmem:[#allocation5 + $0x310] sm:$0xff]
        %v385 = vld [vmem:[#allocation5 + $0x318] sm:$0xff]
        %v386 = vld [vmem:[#allocation5 + $0x320] sm:$0xff]
        %v387 = vld [vmem:[#allocation5 + $0x328] sm:$0xff]
        %v388 = vld [vmem:[#allocation5 + $0x330] sm:$0xff]
        %v389 = vld [vmem:[#allocation5 + $0x338] sm:$0xff]
        %v390 = vld [vmem:[#allocation5 + $0x340] sm:$0xff]
        %v391 = vld [vmem:[#allocation5 + $0x348] sm:$0xff]
        %v392 = vld [vmem:[#allocation5 + $0x350] sm:$0xff]
        %v393 = vld [vmem:[#allocation5 + $0x358] sm:$0xff]
        %v394 = vld [vmem:[#allocation5 + $0x360] sm:$0xff]
        %v395 = vld [vmem:[#allocation5 + $0x368] sm:$0xff]
        %v396 = vld [vmem:[#allocation5 + $0x370] sm:$0xff]
        %v397 = vld [vmem:[#allocation5 + $0x378] sm:$0xff]
        %v398 = vld [vmem:[#allocation5 + $0x380] sm:$0xff]
        %v399 = vld [vmem:[#allocation5 + $0x388] sm:$0xff]
        %v400 = vld [vmem:[#allocation5 + $0x390] sm:$0xff]
        %v401 = vld [vmem:[#allocation5 + $0x398] sm:$0xff]
        %v402 = vld [vmem:[#allocation5 + $0x3a0] sm:$0xff]
        %v403 = vld [vmem:[#allocation5 + $0x3a8] sm:$0xff]
        %v404 = vld [vmem:[#allocation5 + $0x3b0] sm:$0xff]
        %v405 = vld [vmem:[#allocation5 + $0x3b8] sm:$0xff]
        %v406 = vld [vmem:[#allocation5 + $0x3c0] sm:$0xff]
        %v407 = vld [vmem:[#allocation5 + $0x3c8] sm:$0xff]
        %v408 = vld [vmem:[#allocation5 + $0x3d0] sm:$0xff]
        %v409 = vld [vmem:[#allocation5 + $0x3d8] sm:$0xff]
        %v410 = vld [vmem:[#allocation5 + $0x3e0] sm:$0xff]
        %v411 = vld [vmem:[#allocation5 + $0x3e8] sm:$0xff]
        %v412 = vld [vmem:[#allocation5 + $0x3f0] sm:$0xff]
        %v413 = vld [vmem:[#allocation5 + $0x3f8] sm:$0xff]
        %v414 = vld [vmem:[#allocation5 + $0x400] sm:$0xff]
        %v415 = vld [vmem:[#allocation5 + $0x408] sm:$0xff]
        %v416 = vld [vmem:[#allocation5 + $0x410] sm:$0xff]
        %v417 = vld [vmem:[#allocation5 + $0x418] sm:$0xff]
        %v418 = vld [vmem:[#allocation5 + $0x420] sm:$0xff]
        %v419 = vld [vmem:[#allocation5 + $0x428] sm:$0xff]
        %v420 = vld [vmem:[#allocation5 + $0x430] sm:$0xff]
        %v421 = vld [vmem:[#allocation5 + $0x438] sm:$0xff]
        %v422 = vld [vmem:[#allocation5 + $0x440] sm:$0xff]
        %v423 = vld [vmem:[#allocation5 + $0x448] sm:$0xff]
        %v424 = vld [vmem:[#allocation5 + $0x450] sm:$0xff]
        %v425 = vld [vmem:[#allocation5 + $0x458] sm:$0xff]
        %v426 = vld [vmem:[#allocation5 + $0x460] sm:$0xff]
        %v427 = vld [vmem:[#allocation5 + $0x468] sm:$0xff]
        %v428 = vld [vmem:[#allocation5 + $0x470] sm:$0xff]
        %v429 = vld [vmem:[#allocation5 + $0x478] sm:$0xff]
        %v430 = vld [vmem:[#allocation5 + $0x480] sm:$0xff]
        %v431 = vld [vmem:[#allocation5 + $0x488] sm:$0xff]
        %v432 = vld [vmem:[#allocation5 + $0x490] sm:$0xff]
        %v433 = vld [vmem:[#allocation5 + $0x498] sm:$0xff]
        %v434 = vld [vmem:[#allocation5 + $0x4a0] sm:$0xff]
        %v435 = vld [vmem:[#allocation5 + $0x4a8] sm:$0xff]
        %v436 = vld [vmem:[#allocation5 + $0x4b0] sm:$0xff]
        %v437 = vld [vmem:[#allocation5 + $0x4b8] sm:$0xff]
        %v438 = vld [vmem:[#allocation5 + $0x4c0] sm:$0xff]
        %v439 = vld [vmem:[#allocation5 + $0x4c8] sm:$0xff]
        %v440 = vld [vmem:[#allocation5 + $0x4d0] sm:$0xff]
        %v441 = vld [vmem:[#allocation5 + $0x4d8] sm:$0xff]
        %v442 = vld [vmem:[#allocation5 + $0x4e0] sm:$0xff]
        %v443 = vld [vmem:[#allocation5 + $0x4e8] sm:$0xff]
        %v444 = vld [vmem:[#allocation5 + $0x4f0] sm:$0xff]
        %v445 = vld [vmem:[#allocation5 + $0x4f8] sm:$0xff]
        %v446 = vld [vmem:[#allocation5 + $0x500] sm:$0xff]
        %v447 = vld [vmem:[#allocation5 + $0x508] sm:$0xff]
        %v448 = vld [vmem:[#allocation5 + $0x510] sm:$0xff]
        %v449 = vld [vmem:[#allocation5 + $0x518] sm:$0xff]
        %v450 = vld [vmem:[#allocation5 + $0x520] sm:$0xff]
        %v451 = vld [vmem:[#allocation5 + $0x528] sm:$0xff]
        %v452 = vld [vmem:[#allocation5 + $0x530] sm:$0xff]
        %v453 = vld [vmem:[#allocation5 + $0x538] sm:$0xff]
        %v454 = vld [vmem:[#allocation5 + $0x540] sm:$0xff]
        %v455 = vld [vmem:[#allocation5 + $0x548] sm:$0xff]
        %v456 = vld [vmem:[#allocation5 + $0x550] sm:$0xff]
        %v457 = vld [vmem:[#allocation5 + $0x558] sm:$0xff]
        %v458 = vld [vmem:[#allocation5 + $0x560] sm:$0xff]
        %v459 = vld [vmem:[#allocation5 + $0x568] sm:$0xff]
        %v460 = vld [vmem:[#allocation5 + $0x570] sm:$0xff]
        %v461 = vld [vmem:[#allocation5 + $0x578] sm:$0xff]
        %v462 = vld [vmem:[#allocation5 + $0x580] sm:$0xff]
        %v463 = vld [vmem:[#allocation5 + $0x588] sm:$0xff]
        %v464 = vld [vmem:[#allocation5 + $0x590] sm:$0xff]
        %v465 = vld [vmem:[#allocation5 + $0x598] sm:$0xff]
        %v466 = vld [vmem:[#allocation5 + $0x5a0] sm:$0xff]
        %v467 = vld [vmem:[#allocation5 + $0x5a8] sm:$0xff]
        %v468 = vld [vmem:[#allocation5 + $0x5b0] sm:$0xff]
        %v469 = vld [vmem:[#allocation5 + $0x5b8] sm:$0xff]
        %v470 = vld [vmem:[#allocation5 + $0x5c0] sm:$0xff]
        %v471 = vld [vmem:[#allocation5 + $0x5c8] sm:$0xff]
        %v472 = vld [vmem:[#allocation5 + $0x5d0] sm:$0xff]
        %v473 = vld [vmem:[#allocation5 + $0x5d8] sm:$0xff]
        %v474 = vld [vmem:[#allocation5 + $0x5e0] sm:$0xff]
        %v475 = vld [vmem:[#allocation5 + $0x5e8] sm:$0xff]
        %v476 = vld [vmem:[#allocation5 + $0x5f0] sm:$0xff]
        %v477 = vld [vmem:[#allocation5 + $0x5f8] sm:$0xff]
        %v478 = vld [vmem:[#allocation5 + $0x600] sm:$0xff]
        %v479 = vld [vmem:[#allocation5 + $0x608] sm:$0xff]
        %v480 = vld [vmem:[#allocation5 + $0x610] sm:$0xff]
        %v481 = vld [vmem:[#allocation5 + $0x618] sm:$0xff]
        %v482 = vld [vmem:[#allocation5 + $0x620] sm:$0xff]
        %v483 = vld [vmem:[#allocation5 + $0x628] sm:$0xff]
        %v484 = vld [vmem:[#allocation5 + $0x630] sm:$0xff]
        %v485 = vld [vmem:[#allocation5 + $0x638] sm:$0xff]
        %v486 = vld [vmem:[#allocation5 + $0x640] sm:$0xff]
        %v487 = vld [vmem:[#allocation5 + $0x648] sm:$0xff]
        %v488 = vld [vmem:[#allocation5 + $0x650] sm:$0xff]
        %v489 = vld [vmem:[#allocation5 + $0x658] sm:$0xff]
        %v490 = vld [vmem:[#allocation5 + $0x660] sm:$0xff]
        %v491 = vld [vmem:[#allocation5 + $0x668] sm:$0xff]
        %v492 = vld [vmem:[#allocation5 + $0x670] sm:$0xff]
        %v493 = vld [vmem:[#allocation5 + $0x678] sm:$0xff]
        %v494 = vld [vmem:[#allocation5 + $0x680] sm:$0xff]
        %v495 = vld [vmem:[#allocation5 + $0x688] sm:$0xff]
        %v496 = vld [vmem:[#allocation5 + $0x690] sm:$0xff]
        %v497 = vld [vmem:[#allocation5 + $0x698] sm:$0xff]
        %v498 = vld [vmem:[#allocation5 + $0x6a0] sm:$0xff]
        %v499 = vld [vmem:[#allocation5 + $0x6a8] sm:$0xff]
        %v500 = vld [vmem:[#allocation5 + $0x6b0] sm:$0xff]
        %v501 = vld [vmem:[#allocation5 + $0x6b8] sm:$0xff]
        %v502 = vld [vmem:[#allocation5 + $0x6c0] sm:$0xff]
        %v503 = vld [vmem:[#allocation5 + $0x6c8] sm:$0xff]
        %v504 = vld [vmem:[#allocation5 + $0x6d0] sm:$0xff]
        %v505 = vld [vmem:[#allocation5 + $0x6d8] sm:$0xff]
        %v506 = vld [vmem:[#allocation5 + $0x6e0] sm:$0xff]
        %v507 = vld [vmem:[#allocation5 + $0x6e8] sm:$0xff]
        %v508 = vld [vmem:[#allocation5 + $0x6f0] sm:$0xff]
        %v509 = vld [vmem:[#allocation5 + $0x6f8] sm:$0xff]
        %v510 = vld [vmem:[#allocation5 + $0x700] sm:$0xff]
        %v511 = vld [vmem:[#allocation5 + $0x708] sm:$0xff]
        %v512 = vld [vmem:[#allocation5 + $0x710] sm:$0xff]
        %v513 = vld [vmem:[#allocation5 + $0x718] sm:$0xff]
        %v514 = vld [vmem:[#allocation5 + $0x720] sm:$0xff]
        %v515 = vld [vmem:[#allocation5 + $0x728] sm:$0xff]
        %v516 = vld [vmem:[#allocation5 + $0x730] sm:$0xff]
        %v517 = vld [vmem:[#allocation5 + $0x738] sm:$0xff]
        %v518 = vld [vmem:[#allocation5 + $0x740] sm:$0xff]
        %v519 = vld [vmem:[#allocation5 + $0x748] sm:$0xff]
        %v520 = vld [vmem:[#allocation5 + $0x750] sm:$0xff]
        %v521 = vld [vmem:[#allocation5 + $0x758] sm:$0xff]
        %v522 = vld [vmem:[#allocation5 + $0x760] sm:$0xff]
        %v523 = vld [vmem:[#allocation5 + $0x768] sm:$0xff]
        %v524 = vld [vmem:[#allocation5 + $0x770] sm:$0xff]
        %v525 = vld [vmem:[#allocation5 + $0x778] sm:$0xff]
        %v526 = vld [vmem:[#allocation5 + $0x780] sm:$0xff]
        %v527 = vld [vmem:[#allocation5 + $0x788] sm:$0xff]
        %v528 = vld [vmem:[#allocation5 + $0x790] sm:$0xff]
        %v529 = vld [vmem:[#allocation5 + $0x798] sm:$0xff]
        %v530 = vld [vmem:[#allocation5 + $0x7a0] sm:$0xff]
        %v531 = vld [vmem:[#allocation5 + $0x7a8] sm:$0xff]
        %v532 = vld [vmem:[#allocation5 + $0x7b0] sm:$0xff]
        %v533 = vld [vmem:[#allocation5 + $0x7b8] sm:$0xff]
        %v534 = vld [vmem:[#allocation5 + $0x7c0] sm:$0xff]
        %v535 = vld [vmem:[#allocation5 + $0x7c8] sm:$0xff]
        %v536 = vld [vmem:[#allocation5 + $0x7d0] sm:$0xff]
        %v537 = vld [vmem:[#allocation5 + $0x7d8] sm:$0xff]
        %v538 = vld [vmem:[#allocation5 + $0x7e0] sm:$0xff]
        %v539 = vld [vmem:[#allocation5 + $0x7e8] sm:$0xff]
        %v540 = vld [vmem:[#allocation5 + $0x7f0] sm:$0xff]
        %v541 = vld [vmem:[#allocation5 + $0x7f8] sm:$0xff]
        %542 = vmatprep.subr.mxu0 %v287
        %543 = vmatpush1.msra.mxu0 %v286
        %544 = vmatprep.subr.mxu0 %v295
        %545 = vmatpush1.msra.mxu0 %v294
        %546 = vmatprep.subr.mxu0 %v303
        %547 = vmatpush1.msra.mxu0 %v302
        %548 = vmatprep.subr.mxu0 %v311
        %549 = vmatpush1.msra.mxu0 %v310
        %550 = vmatprep.subr.mxu0 %v319
        %551 = vmatpush1.msra.mxu0 %v318
        %552 = vmatprep.subr.mxu0 %v327
        %553 = vmatpush1.msra.mxu0 %v326
        %554 = vmatprep.subr.mxu0 %v335
        %555 = vmatpush1.msra.mxu0 %v334
        %556 = vmatprep.subr.mxu0 %v343
        %557 = vmatpush1.msra.mxu0 %v342
        %558 = vmatprep.subr.mxu0 %v351
        %559 = vmatpush1.msra.mxu0 %v350
        %560 = vmatprep.subr.mxu0 %v359
        %561 = vmatpush1.msra.mxu0 %v358
        %562 = vmatprep.subr.mxu0 %v367
        %563 = vmatpush1.msra.mxu0 %v366
        %564 = vmatprep.subr.mxu0 %v375
        %565 = vmatpush1.msra.mxu0 %v374
        %566 = vmatprep.subr.mxu0 %v383
        %567 = vmatpush1.msra.mxu0 %v382
        %568 = vmatprep.subr.mxu0 %v391
        %569 = vmatpush1.msra.mxu0 %v390
        %570 = vmatprep.subr.mxu0 %v399
        %571 = vmatpush1.msra.mxu0 %v398
        %572 = vmatprep.subr.mxu0 %v407
        %573 = vmatpush1.msra.mxu0 %v406
        %574 = vmatprep.subr.mxu0 %v415
        %575 = vmatpush1.msra.mxu0 %v414
        %576 = vmatprep.subr.mxu0 %v423
        %577 = vmatpush1.msra.mxu0 %v422
        %578 = vmatprep.subr.mxu0 %v431
        %579 = vmatpush1.msra.mxu0 %v430
        %580 = vmatprep.subr.mxu0 %v439
        %581 = vmatpush1.msra.mxu0 %v438
        %582 = vmatprep.subr.mxu0 %v447
        %583 = vmatpush1.msra.mxu0 %v446
        %584 = vmatprep.subr.mxu0 %v455
        %585 = vmatpush1.msra.mxu0 %v454
        %586 = vmatprep.subr.mxu0 %v463
        %587 = vmatpush1.msra.mxu0 %v462
        %588 = vmatprep.subr.mxu0 %v471
        %589 = vmatpush1.msra.mxu0 %v470
        %590 = vmatprep.subr.mxu0 %v479
        %591 = vmatpush1.msra.mxu0 %v478
        %592 = vmatprep.subr.mxu0 %v487
        %593 = vmatpush1.msra.mxu0 %v486
        %594 = vmatprep.subr.mxu0 %v495
        %595 = vmatpush1.msra.mxu0 %v494
        %596 = vmatprep.subr.mxu0 %v503
        %597 = vmatpush1.msra.mxu0 %v502
        %598 = vmatprep.subr.mxu0 %v511
        %599 = vmatpush1.msra.mxu0 %v510
        %600 = vmatprep.subr.mxu0 %v519
        %601 = vmatpush1.msra.mxu0 %v518
        %602 = vmatprep.subr.mxu0 %v527
        %603 = vmatpush1.msra.mxu0 %v526
        %604 = vmatprep.subr.mxu0 %v535
        %605 = vmatpush1.msra.mxu0 %v534
        %606 = vmatprep.mubr.f32.mxu0 %v284
        %607 = vmatmul.mubr.f32.gmra.mrb[0].mxu0 %v282
        %v608 = vpop.f32.mrb[0].mxu0
        %v609 = vadd.f32 0.0, %v608
        %v610 = vpop.f32.mrb[0].mxu0
        %v611 = vadd.f32 0.0, %v610
        %612 = vdwg.mxu0
        %613 = vmatprep.subr.mxu0 %v289
        %614 = vmatpush1.msra.mxu0 %v288
        %615 = vmatprep.subr.mxu0 %v297
        %616 = vmatpush1.msra.mxu0 %v296
        %617 = vmatprep.subr.mxu0 %v305
        %618 = vmatpush1.msra.mxu0 %v304
        %619 = vmatprep.subr.mxu0 %v313
        %620 = vmatpush1.msra.mxu0 %v312
        %621 = vmatprep.subr.mxu0 %v321
        %622 = vmatpush1.msra.mxu0 %v320
        %623 = vmatprep.subr.mxu0 %v329
        %624 = vmatpush1.msra.mxu0 %v328
        %625 = vmatprep.subr.mxu0 %v337
        %626 = vmatpush1.msra.mxu0 %v336
        %627 = vmatprep.subr.mxu0 %v345
        %628 = vmatpush1.msra.mxu0 %v344
        %629 = vmatprep.subr.mxu0 %v353
        %630 = vmatpush1.msra.mxu0 %v352
        %631 = vmatprep.subr.mxu0 %v361
        %632 = vmatpush1.msra.mxu0 %v360
        %633 = vmatprep.subr.mxu0 %v369
        %634 = vmatpush1.msra.mxu0 %v368
        %635 = vmatprep.subr.mxu0 %v377
        %636 = vmatpush1.msra.mxu0 %v376
        %637 = vmatprep.subr.mxu0 %v385
        %638 = vmatpush1.msra.mxu0 %v384
        %639 = vmatprep.subr.mxu0 %v393
        %640 = vmatpush1.msra.mxu0 %v392
        %641 = vmatprep.subr.mxu0 %v401
        %642 = vmatpush1.msra.mxu0 %v400
        %643 = vmatprep.subr.mxu0 %v409
        %644 = vmatpush1.msra.mxu0 %v408
        %645 = vmatprep.subr.mxu0 %v417
        %646 = vmatpush1.msra.mxu0 %v416
        %647 = vmatprep.subr.mxu0 %v425
        %648 = vmatpush1.msra.mxu0 %v424
        %649 = vmatprep.subr.mxu0 %v433
        %650 = vmatpush1.msra.mxu0 %v432
        %651 = vmatprep.subr.mxu0 %v441
        %652 = vmatpush1.msra.mxu0 %v440
        %653 = vmatprep.subr.mxu0 %v449
        %654 = vmatpush1.msra.mxu0 %v448
        %655 = vmatprep.subr.mxu0 %v457
        %656 = vmatpush1.msra.mxu0 %v456
        %657 = vmatprep.subr.mxu0 %v465
        %658 = vmatpush1.msra.mxu0 %v464
        %659 = vmatprep.subr.mxu0 %v473
        %660 = vmatpush1.msra.mxu0 %v472
        %661 = vmatprep.subr.mxu0 %v481
        %662 = vmatpush1.msra.mxu0 %v480
        %663 = vmatprep.subr.mxu0 %v489
        %664 = vmatpush1.msra.mxu0 %v488
        %665 = vmatprep.subr.mxu0 %v497
        %666 = vmatpush1.msra.mxu0 %v496
        %667 = vmatprep.subr.mxu0 %v505
        %668 = vmatpush1.msra.mxu0 %v504
        %669 = vmatprep.subr.mxu0 %v513
        %670 = vmatpush1.msra.mxu0 %v512
        %671 = vmatprep.subr.mxu0 %v521
        %672 = vmatpush1.msra.mxu0 %v520
        %673 = vmatprep.subr.mxu0 %v529
        %674 = vmatpush1.msra.mxu0 %v528
        %675 = vmatprep.subr.mxu0 %v537
        %676 = vmatpush1.msra.mxu0 %v536
        %677 = vmatprep.mubr.f32.mxu0 %v284
        %678 = vmatmul.mubr.f32.gmra.mrb[0].mxu0 %v282
        %v679 = vpop.f32.mrb[0].mxu0
        %v680 = vadd.f32 0.0, %v679
        %v681 = vpop.f32.mrb[0].mxu0
        %v682 = vadd.f32 0.0, %v681
        %683 = vdwg.mxu0
        %684 = vmatprep.subr.mxu0 %v291
        %685 = vmatpush1.msra.mxu0 %v290
        %686 = vmatprep.subr.mxu0 %v299
        %687 = vmatpush1.msra.mxu0 %v298
        %688 = vmatprep.subr.mxu0 %v307
        %689 = vmatpush1.msra.mxu0 %v306
        %690 = vmatprep.subr.mxu0 %v315
        %691 = vmatpush1.msra.mxu0 %v314
        %692 = vmatprep.subr.mxu0 %v323
        %693 = vmatpush1.msra.mxu0 %v322
        %694 = vmatprep.subr.mxu0 %v331
        %695 = vmatpush1.msra.mxu0 %v330
        %696 = vmatprep.subr.mxu0 %v339
        %697 = vmatpush1.msra.mxu0 %v338
        %698 = vmatprep.subr.mxu0 %v347
        %699 = vmatpush1.msra.mxu0 %v346
        %700 = vmatprep.subr.mxu0 %v355
        %701 = vmatpush1.msra.mxu0 %v354
        %702 = vmatprep.subr.mxu0 %v363
        %703 = vmatpush1.msra.mxu0 %v362
        %704 = vmatprep.subr.mxu0 %v371
        %705 = vmatpush1.msra.mxu0 %v370
        %706 = vmatprep.subr.mxu0 %v379
        %707 = vmatpush1.msra.mxu0 %v378
        %708 = vmatprep.subr.mxu0 %v387
        %709 = vmatpush1.msra.mxu0 %v386
        %710 = vmatprep.subr.mxu0 %v395
        %711 = vmatpush1.msra.mxu0 %v394
        %712 = vmatprep.subr.mxu0 %v403
        %713 = vmatpush1.msra.mxu0 %v402
        %714 = vmatprep.subr.mxu0 %v411
        %715 = vmatpush1.msra.mxu0 %v410
        %716 = vmatprep.subr.mxu0 %v419
        %717 = vmatpush1.msra.mxu0 %v418
        %718 = vmatprep.subr.mxu0 %v427
        %719 = vmatpush1.msra.mxu0 %v426
        %720 = vmatprep.subr.mxu0 %v435
        %721 = vmatpush1.msra.mxu0 %v434
        %722 = vmatprep.subr.mxu0 %v443
        %723 = vmatpush1.msra.mxu0 %v442
        %724 = vmatprep.subr.mxu0 %v451
        %725 = vmatpush1.msra.mxu0 %v450
        %726 = vmatprep.subr.mxu0 %v459
        %727 = vmatpush1.msra.mxu0 %v458
        %728 = vmatprep.subr.mxu0 %v467
        %729 = vmatpush1.msra.mxu0 %v466
        %730 = vmatprep.subr.mxu0 %v475
        %731 = vmatpush1.msra.mxu0 %v474
        %732 = vmatprep.subr.mxu0 %v483
        %733 = vmatpush1.msra.mxu0 %v482
        %734 = vmatprep.subr.mxu0 %v491
        %735 = vmatpush1.msra.mxu0 %v490
        %736 = vmatprep.subr.mxu0 %v499
        %737 = vmatpush1.msra.mxu0 %v498
        %738 = vmatprep.subr.mxu0 %v507
        %739 = vmatpush1.msra.mxu0 %v506
        %740 = vmatprep.subr.mxu0 %v515
        %741 = vmatpush1.msra.mxu0 %v514
        %742 = vmatprep.subr.mxu0 %v523
        %743 = vmatpush1.msra.mxu0 %v522
        %744 = vmatprep.subr.mxu0 %v531
        %745 = vmatpush1.msra.mxu0 %v530
        %746 = vmatprep.subr.mxu0 %v539
        %747 = vmatpush1.msra.mxu0 %v538
        %748 = vmatprep.mubr.f32.mxu0 %v284
        %749 = vmatmul.mubr.f32.gmra.mrb[0].mxu0 %v282
        %v750 = vpop.f32.mrb[0].mxu0
        %v751 = vadd.f32 0.0, %v750
        %v752 = vpop.f32.mrb[0].mxu0
        %v753 = vadd.f32 0.0, %v752
        %754 = vdwg.mxu0
        %755 = vmatprep.subr.mxu0 %v293
        %756 = vmatpush1.msra.mxu0 %v292
        %757 = vmatprep.subr.mxu0 %v301
        %758 = vmatpush1.msra.mxu0 %v300
        %759 = vmatprep.subr.mxu0 %v309
        %760 = vmatpush1.msra.mxu0 %v308
        %761 = vmatprep.subr.mxu0 %v317
        %762 = vmatpush1.msra.mxu0 %v316
        %763 = vmatprep.subr.mxu0 %v325
        %764 = vmatpush1.msra.mxu0 %v324
        %765 = vmatprep.subr.mxu0 %v333
        %766 = vmatpush1.msra.mxu0 %v332
        %767 = vmatprep.subr.mxu0 %v341
        %768 = vmatpush1.msra.mxu0 %v340
        %769 = vmatprep.subr.mxu0 %v349
        %770 = vmatpush1.msra.mxu0 %v348
        %771 = vmatprep.subr.mxu0 %v357
        %772 = vmatpush1.msra.mxu0 %v356
        %773 = vmatprep.subr.mxu0 %v365
        %774 = vmatpush1.msra.mxu0 %v364
        %775 = vmatprep.subr.mxu0 %v373
        %776 = vmatpush1.msra.mxu0 %v372
        %777 = vmatprep.subr.mxu0 %v381
        %778 = vmatpush1.msra.mxu0 %v380
        %779 = vmatprep.subr.mxu0 %v389
        %780 = vmatpush1.msra.mxu0 %v388
        %781 = vmatprep.subr.mxu0 %v397
        %782 = vmatpush1.msra.mxu0 %v396
        %783 = vmatprep.subr.mxu0 %v405
        %784 = vmatpush1.msra.mxu0 %v404
        %785 = vmatprep.subr.mxu0 %v413
        %786 = vmatpush1.msra.mxu0 %v412
        %787 = vmatprep.subr.mxu0 %v421
        %788 = vmatpush1.msra.mxu0 %v420
        %789 = vmatprep.subr.mxu0 %v429
        %790 = vmatpush1.msra.mxu0 %v428
        %791 = vmatprep.subr.mxu0 %v437
        %792 = vmatpush1.msra.mxu0 %v436
        %793 = vmatprep.subr.mxu0 %v445
        %794 = vmatpush1.msra.mxu0 %v444
        %795 = vmatprep.subr.mxu0 %v453
        %796 = vmatpush1.msra.mxu0 %v452
        %797 = vmatprep.subr.mxu0 %v461
        %798 = vmatpush1.msra.mxu0 %v460
        %799 = vmatprep.subr.mxu0 %v469
        %800 = vmatpush1.msra.mxu0 %v468
        %801 = vmatprep.subr.mxu0 %v477
        %802 = vmatpush1.msra.mxu0 %v476
        %803 = vmatprep.subr.mxu0 %v485
        %804 = vmatpush1.msra.mxu0 %v484
        %805 = vmatprep.subr.mxu0 %v493
        %806 = vmatpush1.msra.mxu0 %v492
        %807 = vmatprep.subr.mxu0 %v501
        %808 = vmatpush1.msra.mxu0 %v500
        %809 = vmatprep.subr.mxu0 %v509
        %810 = vmatpush1.msra.mxu0 %v508
        %811 = vmatprep.subr.mxu0 %v517
        %812 = vmatpush1.msra.mxu0 %v516
        %813 = vmatprep.subr.mxu0 %v525
        %814 = vmatpush1.msra.mxu0 %v524
        %815 = vmatprep.subr.mxu0 %v533
        %816 = vmatpush1.msra.mxu0 %v532
        %817 = vmatprep.subr.mxu0 %v541
        %818 = vmatpush1.msra.mxu0 %v540
        %819 = vmatprep.mubr.f32.mxu0 %v284
        %820 = vmatmul.mubr.f32.gmra.mrb[0].mxu0 %v282
        %v821 = vpop.f32.mrb[0].mxu0
        %v822 = vadd.f32 0.0, %v821
        %v823 = vpop.f32.mrb[0].mxu0
        %v824 = vadd.f32 0.0, %v823
        %825 = vdwg.mxu0
        %v826 = vadd.f32 %v609, %v611
        %v827 = vadd.f32 %v826, %v680
        %v828 = vadd.f32 %v827, %v682
        %v829 = vadd.f32 %v828, %v751
        %v830 = vadd.f32 %v829, %v753
        %v831 = vadd.f32 %v830, %v822
        %v832 = vadd.f32 %v831, %v824
        %833 = vadd.xlane.f32.xlu0 %v832
        %v834 = vpop.xlane.xlu0 %833
        %v835 = vrcp.pop 1024.0
        %v836 = vmul.f32 %v834, %v835
        %v837 = vmul.f32 %v609, %v609
        %v838 = vmul.f32 %v611, %v611
        %v839 = vmul.f32 %v680, %v680
        %v840 = vmul.f32 %v682, %v682
        %v841 = vmul.f32 %v751, %v751
        %v842 = vmul.f32 %v753, %v753
        %v843 = vmul.f32 %v822, %v822
        %v844 = vmul.f32 %v824, %v824
        %v845 = vadd.f32 %v837, %v838
        %v846 = vadd.f32 %v845, %v839
        %v847 = vadd.f32 %v846, %v840
        %v848 = vadd.f32 %v847, %v841
        %v849 = vadd.f32 %v848, %v842
        %v850 = vadd.f32 %v849, %v843
        %v851 = vadd.f32 %v850, %v844
        %852 = vadd.xlane.f32.xlu0 %v851
        %v853 = vpop.xlane.xlu0 %852
        %v854 = vmul.f32 %v853, %v835
        %v855 = vmul.f32 %v836, %v836
        %v856 = vsub.f32 %v854, %v855
        %v857 = vmax.f32 %v856, 0.0
        %v858 = vsub.f32 %v609, %v836
        %v859 = vsub.f32 %v611, %v836
        %v860 = vsub.f32 %v680, %v836
        %v861 = vsub.f32 %v682, %v836
        %v862 = vsub.f32 %v751, %v836
        %v863 = vsub.f32 %v753, %v836
        %v864 = vsub.f32 %v822, %v836
        %v865 = vsub.f32 %v824, %v836
        %v866 = vadd.f32 %v857, 1e-05
        %v867 = vrsqrt.pop %v866
        %v868 = vmul.f32 %v858, %v867
        %v869 = vmul.f32 %v859, %v867
        %v870 = vmul.f32 %v860, %v867
        %v871 = vmul.f32 %v861, %v867
        %v872 = vmul.f32 %v862, %v867
        %v873 = vmul.f32 %v863, %v867
        %v874 = vmul.f32 %v864, %v867
        %v875 = vmul.f32 %v865, %v867
        %vm876 = vcmp.ge.f32.partialorder %v868, 0.0
        %vm877 = vcmp.ge.f32.partialorder %v869, 0.0
        %vm878 = vcmp.ge.f32.partialorder %v870, 0.0
        %vm879 = vcmp.ge.f32.partialorder %v871, 0.0
        %vm880 = vcmp.ge.f32.partialorder %v872, 0.0
        %vm881 = vcmp.ge.f32.partialorder %v873, 0.0
        %vm882 = vcmp.ge.f32.partialorder %v874, 0.0
        %vm883 = vcmp.ge.f32.partialorder %v875, 0.0
        %v884 = vmul.f32 %v868, 0.01
        %v885 = vmul.f32 %v869, 0.01
        %v886 = vmul.f32 %v870, 0.01
        %v887 = vmul.f32 %v871, 0.01
        %v888 = vmul.f32 %v872, 0.01
        %v889 = vmul.f32 %v873, 0.01
        %v890 = vmul.f32 %v874, 0.01
        %v891 = vmul.f32 %v875, 0.01
        %v892 = vsel %vm876, %v868, %v884
        %v893 = vsel %vm877, %v869, %v885
        %v894 = vsel %vm878, %v870, %v886
        %v895 = vsel %vm879, %v871, %v887
        %v896 = vsel %vm880, %v872, %v888
        %v897 = vsel %vm881, %v873, %v889
        %v898 = vsel %vm882, %v874, %v890
        %v899 = vsel %vm883, %v875, %v891
        %900 = vst [vmem:[%s201] sm:$0xff] %v892
        %901 = vst [vmem:[%s201 + $0x8] sm:$0xff] %v893
        %902 = vst [vmem:[%s201 + $0x10] sm:$0xff] %v894
        %903 = vst [vmem:[%s201 + $0x18] sm:$0xff] %v895
        %904 = vst [vmem:[%s201 + $0x20] sm:$0xff] %v896
        %905 = vst [vmem:[%s201 + $0x28] sm:$0xff] %v897
        %906 = vst [vmem:[%s201 + $0x30] sm:$0xff] %v898
        %907 = vst [vmem:[%s201 + $0x38] sm:$0xff] %v899
        %s908 = sand.u32 %s97, 1
        %s909 = scalar_lea.sflag [#allocation4], %s908
        %s910 = sand.u32 %s97, 1
        %s911 = smul.addr %s910, 64
        %s912 = scalar_lea.vmem [#allocation7], %s911
        // Predicated region
        $region41: #{tpu_custom_call.1} parent=31 // pred_check
          %p913 = pneg %p107
        $region42: #{tpu_custom_call.1} parent=31 // pred_check_branch
          %915 = sbr.rel (%p913) target = $region44
        $region43: #{tpu_custom_call.1} parent=31 // pred_region
          %s917 = ssub.s32 1024, 1024
          %918 = vsyncadd %s909, %s917
          %s919 = smul.addr %s21, 8
          %s920 = smul.addr %s919, 128
          %s921 = scalar_lea.hbm %s3, %s920
          %s923 = sshll.u32 %s912, 4
          %s924 = int_to_ptr.vmem [resolvable:$true] %s923
          %926 = dma.vmem_to_hbm [thread:$0]  %s924, 1024, %s921, %s909
        $region44: #{tpu_custom_call.1} parent=31 // pred_fallthru
          _
      $region32: #{tpu_custom_call.1} parent=5 // pred_fallthru
        _
      %p927 = scmp.le.s32.totalorder 2, %s16
      // Predicated region
      $region45: #{tpu_custom_call.1} parent=5 // pred_check
        %p928 = pneg %p927
      $region46: #{tpu_custom_call.1} parent=5 // pred_check_branch
        %930 = sbr.rel (%p928) target = $region48
      $region47: #{tpu_custom_call.1} parent=5 // pred_region
        %s931 = ssub.s32 %s16, 2
        // Predicated region
        $region49: #{tpu_custom_call.1} parent=47 // pred_check
          %p932 = pneg %p113
        $region50: #{tpu_custom_call.1} parent=47 // pred_check_branch
          %934 = sbr.rel (%p932) target = $region52
        $region51: #{tpu_custom_call.1} parent=47 // pred_region
          %s935 = sand.u32 %s98, 1
          %s936 = scalar_lea.sflag [#allocation4], %s935
          %s937 = sand.u32 %s98, 1
          %s938 = smul.addr %s937, 64
          %s939 = scalar_lea.vmem [#allocation7], %s938
          %940 = dma.done %s936, 1024
        $region52: #{tpu_custom_call.1} parent=47 // pred_fallthru
          _
      $region48: #{tpu_custom_call.1} parent=5 // pred_fallthru
        _
    $region6: #{tpu_custom_call.1} parent=1 // loop_footer
      %s20 = sadd.s32 1, %s16
    $region7: #{tpu_custom_call.1} parent=1 // loop_footer_branch
      %15 = sbr.rel target = $region3
    $region8: #{tpu_custom_call.1} parent=1 // loop_exit
      _
    %941 = vsyncpa [#allocation3], 1
    %s942 = scalar_lea.sflag [#allocation3], 1
    %943 = vsyncpa %s942, 1
    %944 = vsyncpa [#allocation6], 1
    %945 = vsyncpa [#allocation4], 1
    %s946 = scalar_lea.sflag [#allocation4], 1
    %947 = vsyncpa %s946, 1

</llo_original>
